<compile_context>
chip_gen: v5e
topology: v5e:2x2
jax: 0.10.0
libtpu: 0.0.40
codegen_flags: <defaults>
</compile_context>

<pallas_src>
import jax
import jax.numpy as jnp
from jax import lax
from jax.experimental import pallas as pl
from jax.experimental.pallas import tpu as pltpu


def _vq_kernel(x_ref, emb_ref, e2_ref, q_ref, idx_ref, sqerr_ref, encsum_ref,
               sqacc_ref, encacc_ref):
    b = pl.program_id(0)
    t = pl.program_id(1)
    is_first = (b == 0) & (t == 0)
    is_last = ((b == pl.num_programs(0) - 1) &
               (t == pl.num_programs(1) - 1))

    # Initialize the VMEM accumulators once.
    @pl.when(is_first)
    def _():
        sqacc_ref[...] = jnp.zeros_like(sqacc_ref)
        encacc_ref[...] = jnp.zeros_like(encacc_ref)

    x = x_ref[0].astype(jnp.float32)          # (D, T)   transposed row slab
    e = emb_ref[...].astype(jnp.float32)      # (K, D)
    e2 = e2_ref[...]                          # (K, 1)   precomputed ||e_k||^2
    K = e.shape[0]

    # distances^T = ||x||^2 + ||e||^2 - 2 e x   -> (K, T)
    x2 = jnp.sum(x * x, axis=0, keepdims=True)                       # (1, T)
    xe = lax.dot_general(e, x,
                         dimension_numbers=(((1,), (0,)), ((), ())),
                         preferred_element_type=jnp.float32)         # (K, T)
    dist = x2 + e2 - 2.0 * xe                                        # (K, T)

    # argmin over K (sublane axis), first occurrence like torch.argmin
    dmin = jnp.min(dist, axis=0, keepdims=True)                      # (1, T)
    iota_k = lax.broadcasted_iota(jnp.int32, dist.shape, 0)          # (K, T)
    idx = jnp.min(jnp.where(dist == dmin, iota_k, K), axis=0,
                  keepdims=True)                                     # (1, T)

    # one-hot (kept in VMEM only) and quantized rows q^T = e^T @ enc
    enc = (iota_k == idx).astype(jnp.float32)                        # (K, T)
    q = lax.dot_general(e, enc,
                        dimension_numbers=(((0,), (0,)), ((), ())),
                        preferred_element_type=jnp.float32)          # (D, T)

    # lane-dense stores
    q_ref[0] = q.astype(q_ref.dtype)
    idx_ref[0] = idx

    # element-wise accumulation (pure VPU); collapse only at the last step
    diff = q - x
    sqacc_ref[...] += diff * diff
    encacc_ref[...] += enc

    @pl.when(is_last)
    def _():
        sqerr_ref[...] = jnp.sum(sqacc_ref[...]).reshape(1, 1)
        encsum_ref[...] = jnp.sum(encacc_ref[...], axis=1, keepdims=True)


def _pick_tile_hw(hw, d, k):
    """Largest 128-multiple tile that divides hw within a VMEM budget."""
    budget = 12 * 1024 * 1024
    for cand in (1024, 512, 256, 128):
        if hw % cand == 0 and 4 * cand * (4 * d + 4 * k + 8) <= budget:
            return cand
    # Fallback: single full-width block (allowed since it equals the full dim).
    return hw


def vq_ema_forward(x_nchw, embedding_weight, commitment_cost):
    """Forward pass of VectorQuantizerEMA (eval mode).

    Returns (loss, quantized_nchw, perplexity, encodings, encoding_indices),
    matching the PyTorch module's forward outputs.
    """
    B, C, H, W = x_nchw.shape
    D = C
    K, D2 = embedding_weight.shape
    assert D == D2
    HW = H * W
    N = B * HW

    tile = _pick_tile_hw(HW, D, K)
    num_t = HW // tile
    grid = (B, num_t)

    # NCHW -> (B, C, H*W) is a free reshape; the spatial axis becomes the lane
    # axis, so all kernel I/O is lane-dense.  Input stays in its native dtype.
    x3 = x_nchw.reshape(B, C, HW)
    emb_f32 = embedding_weight.astype(jnp.float32)
    e2 = jnp.sum(emb_f32 * emb_f32, axis=1, keepdims=True)  # (K, 1), hoisted

    q3, idx3, sqerr, encsum = pl.pallas_call(
        _vq_kernel,
        out_shape=(
            jax.ShapeDtypeStruct((B, C, HW), x_nchw.dtype),   # quantized (T)
            jax.ShapeDtypeStruct((B, 1, HW), jnp.int32),      # indices
            jax.ShapeDtypeStruct((1, 1), jnp.float32),        # sum sq error
            jax.ShapeDtypeStruct((K, 1), jnp.float32),        # per-code counts
        ),
        grid_spec=pltpu.PrefetchScalarGridSpec(
            num_scalar_prefetch=0,
            grid=grid,
            in_specs=[
                pl.BlockSpec((1, C, tile), lambda b, t: (b, 0, t)),
                pl.BlockSpec((K, D), lambda b, t: (0, 0)),
                pl.BlockSpec((K, 1), lambda b, t: (0, 0)),
            ],
            out_specs=[
                pl.BlockSpec((1, C, tile), lambda b, t: (b, 0, t)),
                pl.BlockSpec((1, 1, tile), lambda b, t: (b, 0, t)),
                pl.BlockSpec((1, 1), lambda b, t: (0, 0)),
                pl.BlockSpec((K, 1), lambda b, t: (0, 0)),
            ],
            scratch_shapes=[
                pltpu.VMEM((C, tile), jnp.float32),   # sq-error accumulator
                pltpu.VMEM((K, tile), jnp.float32),   # per-code count accum
            ],
        ),
        compiler_params=pltpu.CompilerParams(
            dimension_semantics=("arbitrary", "arbitrary"),
            vmem_limit_bytes=32 * 1024 * 1024,
        ),
    )(x3, emb_f32, e2)

    # e_latent_loss = mean((quantized - inputs)^2); loss = commitment_cost * it
    e_latent_loss = sqerr[0, 0] / jnp.float32(N * D)
    loss = commitment_cost * e_latent_loss

    # Straight-through estimator: forward value equals q exactly.
    quantized_nchw = q3.reshape(B, C, H, W)

    # Indices come out in (b, h*W + w) order == NHWC flatten order.
    idx_flat = idx3.reshape(N)
    encoding_indices = idx_flat[:, None]
    encodings = jax.nn.one_hot(idx_flat, K, dtype=jnp.float32)

    avg_probs = encsum[:, 0] / jnp.float32(N)
    perplexity = jnp.exp(-jnp.sum(avg_probs * jnp.log(avg_probs + 1e-10)))

    return loss, quantized_nchw, perplexity, encodings, encoding_indices


def _reference_forward(x_nchw, emb, commitment_cost):
    """Pure-JAX reference mirroring the PyTorch forward (eval mode)."""
    B, C, H, W = x_nchw.shape
    inputs = jnp.transpose(x_nchw, (0, 2, 3, 1))
    flat = inputs.reshape(-1, C)
    dist = (jnp.sum(flat ** 2, axis=1, keepdims=True)
            + jnp.sum(emb ** 2, axis=1)
            - 2.0 * flat @ emb.T)
    idx = jnp.argmin(dist, axis=1)
    enc = jax.nn.one_hot(idx, emb.shape[0], dtype=jnp.float32)
    q = (enc @ emb).reshape(inputs.shape)
    e_latent_loss = jnp.mean((q - inputs) ** 2)
    loss = commitment_cost * e_latent_loss
    q_nchw = jnp.transpose(q, (0, 3, 1, 2))
    avg_probs = jnp.mean(enc, axis=0)
    perplexity = jnp.exp(-jnp.sum(avg_probs * jnp.log(avg_probs + 1e-10)))
    return loss, q_nchw, perplexity, enc, idx[:, None].astype(jnp.int32)


if __name__ == "__main__":
    key = jax.random.PRNGKey(0)
    kx, ke = jax.random.split(key)

    # Module hyperparameters (deterministic, in-script)
    num_embeddings = 16
    embedding_dim = 4
    commitment_cost = 0.25

    # Input: NCHW, channels == embedding_dim
    B, C, H, W = 2, embedding_dim, 16, 16
    x = jax.random.normal(kx, (B, C, H, W), dtype=jnp.float32)
    emb_w = jax.random.normal(ke, (num_embeddings, embedding_dim),
                              dtype=jnp.float32)

    out = vq_ema_forward(x, emb_w, commitment_cost)
    out = jax.block_until_ready(out)
    loss, quantized, perplexity, encodings, encoding_indices = out

    # Correctness check vs. pure-JAX reference
    ref = _reference_forward(x, emb_w, commitment_cost)
    import numpy as np
    np.testing.assert_allclose(np.asarray(loss), np.asarray(ref[0]),
                               rtol=1e-5, atol=1e-5)
    np.testing.assert_allclose(np.asarray(quantized), np.asarray(ref[1]),
                               rtol=1e-5, atol=1e-5)
    np.testing.assert_allclose(np.asarray(perplexity), np.asarray(ref[2]),
                               rtol=1e-5, atol=1e-5)
    np.testing.assert_array_equal(np.asarray(encodings), np.asarray(ref[3]))
    np.testing.assert_array_equal(np.asarray(encoding_indices),
                                  np.asarray(ref[4]))

    print("KERNEL_OK")
</pallas_src>

<mosaic_0001>
module attributes {stable_mosaic.version = 11 : i64} {
  func.func @_vq_kernel(%arg0: i32, %arg1: i32, %arg2: memref<1x4x256xf32, #tpu.memory_space<vmem>>, %arg3: memref<16x4xf32, #tpu.memory_space<vmem>>, %arg4: memref<16x1xf32, #tpu.memory_space<vmem>>, %arg5: memref<1x4x256xf32, #tpu.memory_space<vmem>>, %arg6: memref<1x1x256xi32, #tpu.memory_space<vmem>>, %arg7: memref<1x1xf32, #tpu.memory_space<vmem>>, %arg8: memref<16x1xf32, #tpu.memory_space<vmem>>, %arg9: memref<4x256xf32, #tpu.memory_space<vmem>>, %arg10: memref<16x256xf32, #tpu.memory_space<vmem>>) attributes {dimension_semantics = [#tpu.dimension_semantics<arbitrary>, #tpu.dimension_semantics<arbitrary>], iteration_bounds = array<i64: 2, 1>, scalar_prefetch = 0 : i64, scratch_operands = 2 : i64, tpu.core_type = #tpu.core_type<tc>, window_params = [{transform_indices = @transform_0, window_bounds = array<i64: 1, 4, 256>}, {pipeline_mode = #tpu.pipeline_mode<synchronous>, transform_indices = @transform_1, window_bounds = array<i64: 16, 4>}, {pipeline_mode = #tpu.pipeline_mode<synchronous>, transform_indices = @transform_2, window_bounds = array<i64: 16, 1>}, {transform_indices = @transform_3, window_bounds = array<i64: 1, 4, 256>}, {transform_indices = @transform_4, window_bounds = array<i64: 1, 1, 256>}, {pipeline_mode = #tpu.pipeline_mode<synchronous>, transform_indices = @transform_5, window_bounds = array<i64: 1, 1>}, {pipeline_mode = #tpu.pipeline_mode<synchronous>, transform_indices = @transform_6, window_bounds = array<i64: 16, 1>}]} {
    %c0_i32 = arith.constant 0 : i32
    %0 = arith.cmpi eq, %arg0, %c0_i32 : i32
    %c0_i32_0 = arith.constant 0 : i32
    %1 = arith.cmpi eq, %arg1, %c0_i32_0 : i32
    %2 = arith.andi %0, %1 : i1
    %c1_i32 = arith.constant 1 : i32
    %3 = arith.cmpi eq, %arg0, %c1_i32 : i32
    %c0_i32_1 = arith.constant 0 : i32
    %4 = arith.cmpi eq, %arg1, %c0_i32_1 : i32
    %5 = arith.andi %3, %4 : i1
    %6 = arith.extui %2 : i1 to i32
    %c0_i32_2 = arith.constant 0 : i32
    %7 = arith.cmpi ne, %6, %c0_i32_2 : i32
    scf.if %7 {
      %cst_29 = arith.constant 0.000000e+00 : f32
      %52 = vector.broadcast %cst_29 : f32 to vector<4x256xf32>
      %c0_30 = arith.constant 0 : index
      %c0_31 = arith.constant 0 : index
      %53 = vector.load %arg9[%c0_30, %c0_31] : memref<4x256xf32, #tpu.memory_space<vmem>>, vector<4x256xf32>
      tpu.vector_store %arg9[%c0_30, %c0_31], %52 {strides = array<i32>} : memref<4x256xf32, #tpu.memory_space<vmem>>, vector<4x256xf32>,
      %cst_32 = arith.constant 0.000000e+00 : f32
      %54 = vector.broadcast %cst_32 : f32 to vector<16x256xf32>
      %c0_33 = arith.constant 0 : index
      %c0_34 = arith.constant 0 : index
      %55 = vector.load %arg10[%c0_33, %c0_34] : memref<16x256xf32, #tpu.memory_space<vmem>>, vector<16x256xf32>
      tpu.vector_store %arg10[%c0_33, %c0_34], %54 {strides = array<i32>} : memref<16x256xf32, #tpu.memory_space<vmem>>, vector<16x256xf32>,
    } else {
    }
    %c0 = arith.constant 0 : index
    %c0_3 = arith.constant 0 : index
    %c0_4 = arith.constant 0 : index
    %8 = vector.load %arg2[%c0, %c0_3, %c0_4] : memref<1x4x256xf32, #tpu.memory_space<vmem>>, vector<1x4x256xf32>
    %9 = vector.shape_cast %8 : vector<1x4x256xf32> to vector<4x256xf32>
    %c0_5 = arith.constant 0 : index
    %c0_6 = arith.constant 0 : index
    %10 = vector.load %arg3[%c0_5, %c0_6] : memref<16x4xf32, #tpu.memory_space<vmem>>, vector<16x4xf32>
    %c0_7 = arith.constant 0 : index
    %c0_8 = arith.constant 0 : index
    %11 = vector.load %arg4[%c0_7, %c0_8] : memref<16x1xf32, #tpu.memory_space<vmem>>, vector<16x1xf32>
    %12 = arith.mulf %9, %9 : vector<4x256xf32>
    %cst = arith.constant dense<0.000000e+00> : vector<256xf32>
    %13 = vector.multi_reduction <add>, %12, %cst [0] : vector<4x256xf32> to vector<256xf32>
    %14 = vector.shape_cast %13 : vector<256xf32> to vector<1x256xf32>
    %cst_9 = arith.constant dense<0.000000e+00> : vector<16x256xf32>
    %15 = tpu.matmul %10, %9, %cst_9 {dimension_numbers = #tpu.dot_dimension_numbers<[1], [0], [0], [1], [0, 0, 1, 1], [], []>} : vector<16x4xf32>, vector<4x256xf32>, vector<16x256xf32> -> vector<16x256xf32>
    %16 = vector.broadcast %14 : vector<1x256xf32> to vector<16x256xf32>
    %17 = vector.broadcast %11 : vector<16x1xf32> to vector<16x256xf32>
    %18 = arith.addf %16, %17 : vector<16x256xf32>
    %cst_10 = arith.constant 2.000000e+00 : f32
    %19 = vector.broadcast %cst_10 : f32 to vector<16x256xf32>
    %20 = arith.mulf %19, %15 : vector<16x256xf32>
    %21 = arith.subf %18, %20 : vector<16x256xf32>
    %cst_11 = arith.constant dense<0x7F800000> : vector<256xf32>
    %22 = vector.multi_reduction <minimumf>, %21, %cst_11 [0] : vector<16x256xf32> to vector<256xf32>
    %23 = vector.shape_cast %22 : vector<256xf32> to vector<1x256xf32>
    %24 = tpu.iota {dimensions = array<i32: 0>} : vector<16x256xi32>
    %25 = vector.broadcast %23 : vector<1x256xf32> to vector<16x256xf32>
    %26 = arith.cmpf oeq, %21, %25 : vector<16x256xf32>
    %c16_i32 = arith.constant 16 : i32
    %27 = vector.broadcast %c16_i32 : i32 to vector<16x256xi32>
    %28 = arith.select %26, %24, %27 : vector<16x256xi1>, vector<16x256xi32>
    %cst_12 = arith.constant dense<2147483647> : vector<256xi32>
    %29 = vector.multi_reduction <minsi>, %28, %cst_12 [0] : vector<16x256xi32> to vector<256xi32>
    %30 = vector.shape_cast %29 : vector<256xi32> to vector<1x256xi32>
    %31 = vector.broadcast %30 : vector<1x256xi32> to vector<16x256xi32>
    %32 = arith.cmpi eq, %24, %31 : vector<16x256xi32>
    %33 = arith.extui %32 : vector<16x256xi1> to vector<16x256xi32>
    %34 = arith.sitofp %33 : vector<16x256xi32> to vector<16x256xf32>
    %cst_13 = arith.constant dense<0.000000e+00> : vector<4x256xf32>
    %35 = tpu.matmul %10, %34, %cst_13 {dimension_numbers = #tpu.dot_dimension_numbers<[0], [0], [1], [1], [0, 1, 1, 1], [], []>} : vector<16x4xf32>, vector<16x256xf32>, vector<4x256xf32> -> vector<4x256xf32>
    %c0_14 = arith.constant 0 : index
    %c0_15 = arith.constant 0 : index
    %c0_16 = arith.constant 0 : index
    %36 = vector.load %arg5[%c0_14, %c0_15, %c0_16] : memref<1x4x256xf32, #tpu.memory_space<vmem>>, vector<1x4x256xf32>
    %37 = vector.shape_cast %36 : vector<1x4x256xf32> to vector<4x256xf32>
    %38 = vector.shape_cast %35 : vector<4x256xf32> to vector<1x4x256xf32>
    tpu.vector_store %arg5[%c0_14, %c0_15, %c0_16], %38 {strides = array<i32>} : memref<1x4x256xf32, #tpu.memory_space<vmem>>, vector<1x4x256xf32>,
    %c0_17 = arith.constant 0 : index
    %c0_18 = arith.constant 0 : index
    %c0_19 = arith.constant 0 : index
    %39 = vector.load %arg6[%c0_17, %c0_18, %c0_19] : memref<1x1x256xi32, #tpu.memory_space<vmem>>, vector<1x1x256xi32>
    %40 = vector.shape_cast %39 : vector<1x1x256xi32> to vector<1x256xi32>
    %41 = vector.shape_cast %30 : vector<1x256xi32> to vector<1x1x256xi32>
    tpu.vector_store %arg6[%c0_17, %c0_18, %c0_19], %41 {strides = array<i32>} : memref<1x1x256xi32, #tpu.memory_space<vmem>>, vector<1x1x256xi32>,
    %42 = arith.subf %35, %9 : vector<4x256xf32>
    %c0_20 = arith.constant 0 : index
    %c0_21 = arith.constant 0 : index
    %43 = vector.load %arg9[%c0_20, %c0_21] : memref<4x256xf32, #tpu.memory_space<vmem>>, vector<4x256xf32>
    %44 = arith.mulf %42, %42 : vector<4x256xf32>
    %45 = arith.addf %43, %44 : vector<4x256xf32>
    %c0_22 = arith.constant 0 : index
    %c0_23 = arith.constant 0 : index
    %46 = vector.load %arg9[%c0_22, %c0_23] : memref<4x256xf32, #tpu.memory_space<vmem>>, vector<4x256xf32>
    tpu.vector_store %arg9[%c0_22, %c0_23], %45 {strides = array<i32>} : memref<4x256xf32, #tpu.memory_space<vmem>>, vector<4x256xf32>,
    %c0_24 = arith.constant 0 : index
    %c0_25 = arith.constant 0 : index
    %47 = vector.load %arg10[%c0_24, %c0_25] : memref<16x256xf32, #tpu.memory_space<vmem>>, vector<16x256xf32>
    %48 = arith.addf %47, %34 : vector<16x256xf32>
    %c0_26 = arith.constant 0 : index
    %c0_27 = arith.constant 0 : index
    %49 = vector.load %arg10[%c0_26, %c0_27] : memref<16x256xf32, #tpu.memory_space<vmem>>, vector<16x256xf32>
    tpu.vector_store %arg10[%c0_26, %c0_27], %48 {strides = array<i32>} : memref<16x256xf32, #tpu.memory_space<vmem>>, vector<16x256xf32>,
    %50 = arith.extui %5 : i1 to i32
    %c0_i32_28 = arith.constant 0 : i32
    %51 = arith.cmpi ne, %50, %c0_i32_28 : i32
    scf.if %51 {
      %c0_29 = arith.constant 0 : index
      %c0_30 = arith.constant 0 : index
      %52 = vector.load %arg9[%c0_29, %c0_30] : memref<4x256xf32, #tpu.memory_space<vmem>>, vector<4x256xf32>
      %53 = vector.shape_cast %52 : vector<4x256xf32> to vector<1x4x256xf32>
      %cst_31 = arith.constant dense<0.000000e+00> : vector<1xf32>
      %54 = vector.multi_reduction <add>, %53, %cst_31 [1, 2] : vector<1x4x256xf32> to vector<1xf32>
      %55 = vector.shape_cast %54 : vector<1xf32> to vector<1x1x1xf32>
      %56 = vector.extract %55[0, 0, 0] : f32 from vector<1x1x1xf32>
      %57 = vector.broadcast %56 : f32 to vector<1x1xf32>
      %c0_32 = arith.constant 0 : index
      %c0_33 = arith.constant 0 : index
      %58 = vector.load %arg7[%c0_32, %c0_33] : memref<1x1xf32, #tpu.memory_space<vmem>>, vector<1x1xf32>
      tpu.vector_store %arg7[%c0_32, %c0_33], %57 {strides = array<i32>} : memref<1x1xf32, #tpu.memory_space<vmem>>, vector<1x1xf32>,
      %c0_34 = arith.constant 0 : index
      %c0_35 = arith.constant 0 : index
      %59 = vector.load %arg10[%c0_34, %c0_35] : memref<16x256xf32, #tpu.memory_space<vmem>>, vector<16x256xf32>
      %cst_36 = arith.constant dense<0.000000e+00> : vector<16xf32>
      %60 = vector.multi_reduction <add>, %59, %cst_36 [1] : vector<16x256xf32> to vector<16xf32>
      %61 = vector.shape_cast %60 : vector<16xf32> to vector<16x1xf32>
      %c0_37 = arith.constant 0 : index
      %c0_38 = arith.constant 0 : index
      %62 = vector.load %arg8[%c0_37, %c0_38] : memref<16x1xf32, #tpu.memory_space<vmem>>, vector<16x1xf32>
      tpu.vector_store %arg8[%c0_37, %c0_38], %61 {strides = array<i32>} : memref<16x1xf32, #tpu.memory_space<vmem>>, vector<16x1xf32>,
    } else {
    }
    return
  }
  func.func @transform_0(%arg0: i32, %arg1: i32) -> (i32, i32, i32) {
    %c0_i32 = arith.constant 0 : i32
    %c0_i32_0 = arith.constant 0 : i32
    return %arg0, %c0_i32, %arg1 : i32, i32, i32
  }
  func.func @transform_1(%arg0: i32, %arg1: i32) -> (i32, i32) {
    %c0_i32 = arith.constant 0 : i32
    %c0_i32_0 = arith.constant 0 : i32
    %c0_i32_1 = arith.constant 0 : i32
    return %c0_i32, %c0_i32_0 : i32, i32
  }
  func.func @transform_2(%arg0: i32, %arg1: i32) -> (i32, i32) {
    %c0_i32 = arith.constant 0 : i32
    %c0_i32_0 = arith.constant 0 : i32
    %c0_i32_1 = arith.constant 0 : i32
    return %c0_i32, %c0_i32_0 : i32, i32
  }
  func.func @transform_3(%arg0: i32, %arg1: i32) -> (i32, i32, i32) {
    %c0_i32 = arith.constant 0 : i32
    %c0_i32_0 = arith.constant 0 : i32
    return %arg0, %c0_i32, %arg1 : i32, i32, i32
  }
  func.func @transform_4(%arg0: i32, %arg1: i32) -> (i32, i32, i32) {
    %c0_i32 = arith.constant 0 : i32
    %c0_i32_0 = arith.constant 0 : i32
    return %arg0, %c0_i32, %arg1 : i32, i32, i32
  }
  func.func @transform_5(%arg0: i32, %arg1: i32) -> (i32, i32) {
    %c0_i32 = arith.constant 0 : i32
    %c0_i32_0 = arith.constant 0 : i32
    %c0_i32_1 = arith.constant 0 : i32
    return %c0_i32, %c0_i32_0 : i32, i32
  }
  func.func @transform_6(%arg0: i32, %arg1: i32) -> (i32, i32) {
    %c0_i32 = arith.constant 0 : i32
    %c0_i32_0 = arith.constant 0 : i32
    %c0_i32_1 = arith.constant 0 : i32
    return %c0_i32, %c0_i32_0 : i32, i32
  }
}

</mosaic_0001>

<llo_original>
// kernel: tpu_custom_call.1
$region0: #{tpu_custom_call.1}
  #allocation0 [shape = 'u32[]', space=smem, size = 0x4, offset = 0x4, fixed_abs, tag = 'smem constant byte address 0x4 - core index']
  #allocation1 [shape = 'u32[72,128]{1,0:T(1,128)}', space=vmem, size = 0x9000, scoped, tag = 'internal scratch']
  #allocation2 [shape = 'f32[4,256]{1,0:T(4,128)}', space=vmem, size = 0x1000, scoped, tag = 'scratch operand']
  #allocation3 [shape = 'f32[16,256]{1,0:T(8,128)}', space=vmem, size = 0x4000, scoped, tag = 'scratch operand']
  %s0 = inlined_call_operand.vmem [shape: f32[2,4,256], index: 0, kind: input, shape index: {}]
  %s1 = inlined_call_operand.vmem [shape: f32[16,4], index: 1, kind: input, shape index: {}]
  %s2 = inlined_call_operand.vmem [shape: f32[16,1], index: 2, kind: input, shape index: {}]
  %s3 = inlined_call_operand.hbm [shape: f32[2,4,256], index: 3, kind: output, shape index: {0}]
  %s4 = inlined_call_operand.hbm [shape: s32[2,1,256], index: 4, kind: output, shape index: {1}]
  %s5 = inlined_call_operand.hbm [shape: f32[1,1], index: 5, kind: output, shape index: {2}]
  %s6 = inlined_call_operand.vmem [shape: f32[16,1], index: 6, kind: output, shape index: {3}]
  %7 = xla_tuple %s3, %s4, %s5, %s6
  %s8 = sld [smem:[#allocation0]]
  $region77: #{tpu_custom_call.1} parent=0
    _
  %s10 = ssub.s32 1, %s8
  %s11 = scalar_select 0, %s10, %s8
  $region1: #{tpu_custom_call.1} parent=0
    #allocation4 [shape = 'u8[8192]{0}', space=vmem, size = 0x2000, scoped, tag = 'output window, operand 0']
    #allocation5 [shape = 's32[2]{0}', space=sflag, size = 0x8, scoped, tag = 'scoped memory for tpu_custom_call.1']
    #allocation6 [shape = 'u8[2048]{0}', space=vmem, size = 0x800, scoped, tag = 'output window, operand 1']
    #allocation7 [shape = 's32[2]{0}', space=sflag, size = 0x8, scoped, tag = 'scoped memory for tpu_custom_call.1']
    #allocation8 [shape = 'u8[512]{0}', space=vmem, size = 0x400, scoped, tag = 'output window, operand 2, single buffered']
    %12 = vsyncpa [#allocation5], 0
    %s13 = scalar_lea.sflag [#allocation5], 1
    %14 = vsyncpa %s13, 0
    %15 = vsyncpa [#allocation7], 0
    %s16 = scalar_lea.sflag [#allocation7], 1
    %17 = vsyncpa %s16, 0
    loop: start=0, step=1, limit=4
    $region2: #{tpu_custom_call.1} parent=1 // loop_pre_header
      _
    $region3: #{tpu_custom_call.1} parent=1 // loop_header
      %s19 = sphi 0, %s23
      %p20 = scmp.ge.s32.totalorder %s19, 4
      %s26 = sphi 0, %s38
      %s27 = sphi 0, %s34
      %s28 = sphi 0, %s26
      %s29 = sphi 0, %s27
      %s30 = sphi 0, %s28
      %s31 = sphi 0, %s29
      %s43 = sphi 0, %s45
      %s46 = sphi 0, %s43
      %s47 = sphi 0, %s46
      %s63 = sphi 0, %s47
      %s67 = sphi 0, %s67
      %s69 = sphi 0, %s67
      %s70 = sphi 0, %s69
      %s84 = sphi 0, %s70
      %s88 = sphi 0, %s88
      %s90 = sphi 0, %s88
      %s91 = sphi 0, %s90
      %s105 = sphi 0, %s91
      %s113 = sphi 0, %s115
      %s116 = sphi 0, %s113
      %s117 = sphi 0, %s116
      %s133 = sphi 0, %s117
      %s141 = sphi 0, %s143
      %s144 = sphi 0, %s141
      %s145 = sphi 0, %s144
      %s161 = sphi 0, %s145
      %s165 = sphi 0, %s165
      %s167 = sphi 0, %s165
      %s168 = sphi 0, %s167
      %s182 = sphi 0, %s168
      %s186 = sphi 0, %s186
      %s188 = sphi 0, %s186
      %s189 = sphi 0, %s188
      %s203 = sphi 0, %s189
    $region4: #{tpu_custom_call.1} parent=1 // loop_header_branch
      %22 = sbr.rel (%p20) target = $region8
    $region5: #{tpu_custom_call.1} parent=1 // loop_body
      %s24 = ssub.s32 %s19, 1
      %s25 = ssub.s32 %s19, 2
      %s32 = sadd.s32 1, %s27
      %p33 = scmp.ge.s32.totalorder %s32, 1
      %s34 = scalar_select %p33, 0, %s32
      %s35 = sadd.s32 1, %s26
      %s36 = scalar_select %p33, %s35, %s26
      %p37 = scmp.ge.s32.totalorder %s36, 2
      %s38 = scalar_select %p37, 0, %s36
      %s39 = ssub.s32 %s26, %s38
      %s40 = ssub.s32 %s27, %s34
      %s41 = sor.u32 %s39, %s40
      %p42 = scmp.eq.s32.totalorder %s41, 0
      %s44 = sadd.s32 %s43, 1
      %s45 = scalar_select %p42, %s43, %s44
      %p48 = pneg %p42
      %p49 = scmp.eq.s32.totalorder %s19, 1
      %p50 = por %p48, %p49
      %p51 = scmp.ne.s32.totalorder %s43, %s46
      %p52 = scmp.eq.s32.totalorder %s19, 0
      %p53 = por %p51, %p52
      %p54 = scmp.ne.s32.totalorder %s43, %s46
      %p55 = scmp.eq.s32.totalorder %s24, 1
      %p56 = por %p54, %p55
      %p57 = scmp.ne.s32.totalorder %s46, %s47
      %p58 = scmp.eq.s32.totalorder %s24, 0
      %p59 = por %p57, %p58
      %p60 = scmp.ne.s32.totalorder %s46, %s47
      %p61 = scmp.eq.s32.totalorder %s25, 1
      %p62 = por %p60, %p61
      %p64 = scmp.ne.s32.totalorder %s47, %s63
      %p65 = scmp.eq.s32.totalorder %s25, 0
      %p66 = por %p64, %p65
      %s68 = sadd.s32 %s67, 1
      %p71 = scmp.eq.s32.totalorder %s19, 1
      %p72 = scmp.ne.s32.totalorder %s67, %s69
      %p73 = scmp.eq.s32.totalorder %s19, 0
      %p74 = por %p72, %p73
      %p75 = scmp.ne.s32.totalorder %s67, %s69
      %p76 = scmp.eq.s32.totalorder %s24, 1
      %p77 = por %p75, %p76
      %p78 = scmp.ne.s32.totalorder %s69, %s70
      %p79 = scmp.eq.s32.totalorder %s24, 0
      %p80 = por %p78, %p79
      %p81 = scmp.ne.s32.totalorder %s69, %s70
      %p82 = scmp.eq.s32.totalorder %s25, 1
      %p83 = por %p81, %p82
      %p85 = scmp.ne.s32.totalorder %s70, %s84
      %p86 = scmp.eq.s32.totalorder %s25, 0
      %p87 = por %p85, %p86
      %s89 = sadd.s32 %s88, 1
      %p92 = scmp.eq.s32.totalorder %s19, 1
      %p93 = scmp.ne.s32.totalorder %s88, %s90
      %p94 = scmp.eq.s32.totalorder %s19, 0
      %p95 = por %p93, %p94
      %p96 = scmp.ne.s32.totalorder %s88, %s90
      %p97 = scmp.eq.s32.totalorder %s24, 1
      %p98 = por %p96, %p97
      %p99 = scmp.ne.s32.totalorder %s90, %s91
      %p100 = scmp.eq.s32.totalorder %s24, 0
      %p101 = por %p99, %p100
      %p102 = scmp.ne.s32.totalorder %s90, %s91
      %p103 = scmp.eq.s32.totalorder %s25, 1
      %p104 = por %p102, %p103
      %p106 = scmp.ne.s32.totalorder %s91, %s105
      %p107 = scmp.eq.s32.totalorder %s25, 0
      %p108 = por %p106, %p107
      %s109 = ssub.s32 %s26, %s38
      %s110 = ssub.s32 %s27, %s34
      %s111 = sor.u32 %s109, %s110
      %p112 = scmp.eq.s32.totalorder %s111, 0
      %s114 = sadd.s32 %s113, 1
      %s115 = scalar_select %p112, %s113, %s114
      %p118 = pneg %p112
      %p119 = scmp.eq.s32.totalorder %s19, 1
      %p120 = por %p118, %p119
      %p121 = scmp.ne.s32.totalorder %s113, %s116
      %p122 = scmp.eq.s32.totalorder %s19, 0
      %p123 = por %p121, %p122
      %p124 = scmp.ne.s32.totalorder %s113, %s116
      %p125 = scmp.eq.s32.totalorder %s24, 1
      %p126 = por %p124, %p125
      %p127 = scmp.ne.s32.totalorder %s116, %s117
      %p128 = scmp.eq.s32.totalorder %s24, 0
      %p129 = por %p127, %p128
      %p130 = scmp.ne.s32.totalorder %s116, %s117
      %p131 = scmp.eq.s32.totalorder %s25, 1
      %p132 = por %p130, %p131
      %p134 = scmp.ne.s32.totalorder %s117, %s133
      %p135 = scmp.eq.s32.totalorder %s25, 0
      %p136 = por %p134, %p135
      %s137 = ssub.s32 %s26, %s38
      %s138 = ssub.s32 %s27, %s34
      %s139 = sor.u32 %s137, %s138
      %p140 = scmp.eq.s32.totalorder %s139, 0
      %s142 = sadd.s32 %s141, 1
      %s143 = scalar_select %p140, %s141, %s142
      %p146 = pneg %p140
      %p147 = scmp.eq.s32.totalorder %s19, 1
      %p148 = por %p146, %p147
      %p149 = scmp.ne.s32.totalorder %s141, %s144
      %p150 = scmp.eq.s32.totalorder %s19, 0
      %p151 = por %p149, %p150
      %p152 = scmp.ne.s32.totalorder %s141, %s144
      %p153 = scmp.eq.s32.totalorder %s24, 1
      %p154 = por %p152, %p153
      %p155 = scmp.ne.s32.totalorder %s144, %s145
      %p156 = scmp.eq.s32.totalorder %s24, 0
      %p157 = por %p155, %p156
      %p158 = scmp.ne.s32.totalorder %s144, %s145
      %p159 = scmp.eq.s32.totalorder %s25, 1
      %p160 = por %p158, %p159
      %p162 = scmp.ne.s32.totalorder %s145, %s161
      %p163 = scmp.eq.s32.totalorder %s25, 0
      %p164 = por %p162, %p163
      %s166 = sadd.s32 %s165, 1
      %p169 = scmp.eq.s32.totalorder %s19, 1
      %p170 = scmp.ne.s32.totalorder %s165, %s167
      %p171 = scmp.eq.s32.totalorder %s19, 0
      %p172 = por %p170, %p171
      %p173 = scmp.ne.s32.totalorder %s165, %s167
      %p174 = scmp.eq.s32.totalorder %s24, 1
      %p175 = por %p173, %p174
      %p176 = scmp.ne.s32.totalorder %s167, %s168
      %p177 = scmp.eq.s32.totalorder %s24, 0
      %p178 = por %p176, %p177
      %p179 = scmp.ne.s32.totalorder %s167, %s168
      %p180 = scmp.eq.s32.totalorder %s25, 1
      %p181 = por %p179, %p180
      %p183 = scmp.ne.s32.totalorder %s168, %s182
      %p184 = scmp.eq.s32.totalorder %s25, 0
      %p185 = por %p183, %p184
      %s187 = sadd.s32 %s186, 1
      %p190 = scmp.eq.s32.totalorder %s19, 1
      %p191 = scmp.ne.s32.totalorder %s186, %s188
      %p192 = scmp.eq.s32.totalorder %s19, 0
      %p193 = por %p191, %p192
      %p194 = scmp.ne.s32.totalorder %s186, %s188
      %p195 = scmp.eq.s32.totalorder %s24, 1
      %p196 = por %p194, %p195
      %p197 = scmp.ne.s32.totalorder %s188, %s189
      %p198 = scmp.eq.s32.totalorder %s24, 0
      %p199 = por %p197, %p198
      %p200 = scmp.ne.s32.totalorder %s188, %s189
      %p201 = scmp.eq.s32.totalorder %s25, 1
      %p202 = por %p200, %p201
      %p204 = scmp.ne.s32.totalorder %s189, %s203
      %p205 = scmp.eq.s32.totalorder %s25, 0
      %p206 = por %p204, %p205
      %p207 = scmp.le.s32.totalorder 1, %s19
      %p208 = scmp.lt.s32.totalorder %s19, 3
      %p209 = pnand %p207, %p208
      %p210 = pneg %p209
      // Predicated region
      $region9: #{tpu_custom_call.1} parent=5 // pred_check
        _
      $region10: #{tpu_custom_call.1} parent=5 // pred_check_branch
        %212 = sbr.rel (%p209) target = $region12
      $region11: #{tpu_custom_call.1} parent=5 // pred_region
        %s213 = ssub.s32 %s19, 1
        // Predicated region
        $region13: #{tpu_custom_call.1} parent=11 // pred_check
          %p214 = pneg %p80
        $region14: #{tpu_custom_call.1} parent=11 // pred_check_branch
          %216 = sbr.rel (%p214) target = $region16
        $region15: #{tpu_custom_call.1} parent=11 // pred_region
          _
        $region16: #{tpu_custom_call.1} parent=11 // pred_fallthru
          _
        // Predicated region
        $region17: #{tpu_custom_call.1} parent=11 // pred_check
          %p217 = pneg %p101
        $region18: #{tpu_custom_call.1} parent=11 // pred_check_branch
          %219 = sbr.rel (%p217) target = $region20
        $region19: #{tpu_custom_call.1} parent=11 // pred_region
          _
        $region20: #{tpu_custom_call.1} parent=11 // pred_fallthru
          _
      $region12: #{tpu_custom_call.1} parent=5 // pred_fallthru
        _
      %p220 = scmp.lt.s32.totalorder %s19, 2
      // Predicated region
      $region21: #{tpu_custom_call.1} parent=5 // pred_check
        %p221 = pneg %p220
      $region22: #{tpu_custom_call.1} parent=5 // pred_check_branch
        %223 = sbr.rel (%p221) target = $region24
      $region23: #{tpu_custom_call.1} parent=5 // pred_region
        // Predicated region
        $region25: #{tpu_custom_call.1} parent=23 // pred_check
          %p224 = pneg %p53
        $region26: #{tpu_custom_call.1} parent=23 // pred_check_branch
          %226 = sbr.rel (%p224) target = $region28
        $region27: #{tpu_custom_call.1} parent=23 // pred_region
          %s227 = smul.u32 2, %s27
          %p228 = scmp.lt.s32.totalorder %s26, 1
          %s229 = scalar_select %p228, %s26, 1
          %p230 = scmp.lt.s32.totalorder %s227, 1
          %s231 = scalar_select %p230, %s227, 1
          %s232 = smul.addr %s229, 2
          %s233 = sadd.s32 %s231, %s232
          %s234 = smul.addr %s233, 4
          %s235 = scalar_lea.vmem %s0, %s234
          %s236 = smul.u32 2, %s27
        $region28: #{tpu_custom_call.1} parent=23 // pred_fallthru
          _
      $region24: #{tpu_custom_call.1} parent=5 // pred_fallthru
        _
      %p237 = scmp.le.s32.totalorder 1, %s19
      %p238 = scmp.lt.s32.totalorder %s19, 3
      %p239 = pnand %p237, %p238
      %p240 = pneg %p239
      // Predicated region
      $region29: #{tpu_custom_call.1} parent=5 // pred_check
        _
      $region30: #{tpu_custom_call.1} parent=5 // pred_check_branch
        %242 = sbr.rel (%p239) target = $region32
      $region31: #{tpu_custom_call.1} parent=5 // pred_region
        %s243 = ssub.s32 %s19, 1
        %s244 = smul.u32 2, %s29
        %p245 = scmp.lt.s32.totalorder %s28, 1
        %s246 = scalar_select %p245, %s28, 1
        %p247 = scmp.lt.s32.totalorder %s244, 1
        %s248 = scalar_select %p247, %s244, 1
        %s249 = smul.addr %s246, 2
        %s250 = sadd.s32 %s248, %s249
        %s251 = smul.addr %s250, 4
        %s252 = scalar_lea.vmem %s0, %s251
        %p253 = pneg %p59
        %p254 = pneg %p56
        %p255 = pneg %p80
        %p256 = pneg %p77
        %p257 = pneg %p101
        %p258 = pneg %p98
        %p259 = pneg %p129
        %p260 = pneg %p126
        %s261 = sand.u32 %s116, 1
        %s262 = scalar_lea.sflag [#allocation5], %s261
        %s263 = sand.u32 %s116, 1
        %s264 = smul.addr %s263, 8
        %s265 = scalar_lea.vmem [#allocation4], %s264
        %p266 = pneg %p157
        %p267 = pneg %p154
        %s268 = sand.u32 %s24, 1
        %s269 = scalar_lea.sflag [#allocation7], %s268
        %s270 = sand.u32 %s144, 1
        %s271 = smul.addr %s270, 2
        %s272 = scalar_lea.vmem [#allocation6], %s271
        %p273 = pneg %p178
        %p274 = pneg %p175
        %p275 = pneg %p199
        %p276 = pneg %p196
        %s277 = smul.u32 2, %s29
        %p278 = scmp.lt.s32.totalorder %s28, 1
        %s279 = scalar_select %p278, %s28, 1
        %p280 = scmp.lt.s32.totalorder %s277, 1
        %s281 = scalar_select %p280, %s277, 1
        %s282 = smul.addr %s279, 2
        %s283 = sadd.s32 %s281, %s282
        %s284 = smul.addr %s283, 4
        %s285 = scalar_lea.vmem %s0, %s284
        %s286 = smul.u32 2, %s29
        %s287 = smul.u32 2, %s29
        %s288 = smul.u32 2, %s29
        %p289 = scmp.eq.s32.totalorder %s28, 0
        %p290 = scmp.eq.s32.totalorder %s29, 0
        %p291 = pnand %p289, %p290
        %p292 = pneg %p291
        %p293 = scmp.eq.s32.totalorder %s28, 1
        %p294 = pnand %p293, %p290
        %p295 = pneg %p294
        // Predicated region
        $region33: #{tpu_custom_call.1} parent=31 // pred_check
          _
        $region34: #{tpu_custom_call.1} parent=31 // pred_check_branch
          %297 = sbr.rel (%p291) target = $region36
        $region35: #{tpu_custom_call.1} parent=31 // pred_region
          %298 = vst [vmem:[#allocation2] sm:$0xff] 0.0
          %299 = vst [vmem:[#allocation3] sm:$0xff] 0.0
          %300 = vst [vmem:[#allocation3 + $0x8] sm:$0xff] 0.0
          %301 = vst [vmem:[#allocation3 + $0x10] sm:$0xff] 0.0
          %302 = vst [vmem:[#allocation3 + $0x18] sm:$0xff] 0.0
        $region36: #{tpu_custom_call.1} parent=31 // pred_fallthru
          _
        %v303 = vld [vmem:[%s285] sm:$0xff]
        %v304 = vld [vmem:[%s1] sm:$0xff]
        %v305 = vld [vmem:[%s1 + $0x8] sm:$0xff]
        %v306 = vld [vmem:[%s2] sm:$0xff]
        %v307 = vld [vmem:[%s2 + $0x8] sm:$0xff]
        %v308 = vmul.f32 %v303, %v303
        %310 = vst [vmem:[#allocation1] ss:$2 sm:$0xff] %v308
        %v311 = vld.sshfl [vmem:[#allocation1] sm:$0xff pattern:$0x75316420]
        %v312 = vld.sshfl [vmem:[#allocation1 + $0x8] sm:$0xff pattern:$0x75316420]
        %vm315 = vcmask 1043456
        %v316 = vsel %vm315, %v311, 0.0
        %v317 = vrot.slane %v316, 4
        %v318 = vadd.f32 %v316, %v317
        %v319 = vrot.slane %v318, 2
        %v320 = vadd.f32 %v318, %v319
        %v321 = vrot.slane %v320, 1
        %v322 = vadd.f32 %v320, %v321
        %v323 = vsel %vm315, %v312, 0.0
        %v324 = vrot.slane %v323, 4
        %v325 = vadd.f32 %v323, %v324
        %v326 = vrot.slane %v325, 2
        %v327 = vadd.f32 %v325, %v326
        %v328 = vrot.slane %v327, 1
        %v329 = vadd.f32 %v327, %v328
        %331 = vst [vmem:[#allocation1] ss:$2 sm:$0xff] %v303
        %v332 = vld.sshfl [vmem:[#allocation1] sm:$0xff pattern:$0x75316420]
        %v333 = vld.sshfl [vmem:[#allocation1 + $0x8] sm:$0xff pattern:$0x75316420]
        %vm334 = vcmask 31744
        %v336 = vsel %vm334, %v304, 0
        %v339 = vsel %vm334, %v305, 0
        %v341 = vsel %vm315, %v332, 0
        %v343 = vsel %vm315, %v333, 0
        %345 = vmatpush.msra.mxu0 0.0
        %346 = vmatpush.msra.mxu0 0.0
        %347 = vmatpush.msra.mxu0 0.0
        %348 = vmatpush.msra.mxu0 0.0
        %349 = vmatpush.msra.mxu0 0.0
        %350 = vmatpush.msra.mxu0 0.0
        %351 = vmatpush.msra.mxu0 0.0
        %352 = vmatpush.msra.mxu0 0.0
        %353 = vmatpush.msra.mxu0 0.0
        %354 = vmatpush.msra.mxu0 0.0
        %355 = vmatpush.msra.mxu0 0.0
        %356 = vmatpush.msra.mxu0 0.0
        %357 = vmatpush.msra.mxu0 0.0
        %358 = vmatpush.msra.mxu0 0.0
        %359 = vmatpush.msra.mxu0 0.0
        %360 = vmatpush.msra.mxu0 %v341
        %361 = vmatmul.f32.gmra.mxu0 %v336
        %v362 = vpop.f32.mrf.mxu0
        %v363 = vadd.f32 0.0, %v362
        %364 = vmatmul.f32.gmra.mxu0 %v339
        %v365 = vpop.f32.mrf.mxu0
        %v366 = vadd.f32 0.0, %v365
        %367 = vdwg.mxu0
        %368 = vmatpush.msra.mxu0 0.0
        %369 = vmatpush.msra.mxu0 0.0
        %370 = vmatpush.msra.mxu0 0.0
        %371 = vmatpush.msra.mxu0 0.0
        %372 = vmatpush.msra.mxu0 0.0
        %373 = vmatpush.msra.mxu0 0.0
        %374 = vmatpush.msra.mxu0 0.0
        %375 = vmatpush.msra.mxu0 0.0
        %376 = vmatpush.msra.mxu0 0.0
        %377 = vmatpush.msra.mxu0 0.0
        %378 = vmatpush.msra.mxu0 0.0
        %379 = vmatpush.msra.mxu0 0.0
        %380 = vmatpush.msra.mxu0 0.0
        %381 = vmatpush.msra.mxu0 0.0
        %382 = vmatpush.msra.mxu0 0.0
        %383 = vmatpush.msra.mxu0 %v343
        %384 = vmatmul.f32.gmra.mxu0 %v336
        %v385 = vpop.f32.mrf.mxu0
        %v386 = vadd.f32 0.0, %v385
        %387 = vmatmul.f32.gmra.mxu0 %v339
        %v388 = vpop.f32.mrf.mxu0
        %v389 = vadd.f32 0.0, %v388
        %390 = vdwg.mxu0
        %392 = vset.pattern.permute.xlu0 0
        %393 = vperm.xlu0 %392, %v306
        %v394 = vpop.permute.xlu0 %393
        %397 = vset.pattern.permute.xlu0 0
        %398 = vperm.xlu0 %397, %v307
        %v399 = vpop.permute.xlu0 %398
        %v401 = vadd.f32 %v322, %v394
        %v402 = vadd.f32 %v329, %v394
        %v403 = vadd.f32 %v322, %v399
        %v404 = vadd.f32 %v329, %v399
        %v405 = vmul.f32 %v363, 2.0
        %v406 = vmul.f32 %v386, 2.0
        %v407 = vmul.f32 %v366, 2.0
        %v408 = vmul.f32 %v389, 2.0
        %v409 = vsub.f32 %v401, %v405
        %v410 = vsub.f32 %v402, %v406
        %v411 = vsub.f32 %v403, %v407
        %v412 = vsub.f32 %v404, %v408
        %v413 = vmin.f32 %v409, %v411
        %v414 = vrot.slane %v413, 4
        %v415 = vmin.f32 %v413, %v414
        %v416 = vrot.slane %v415, 2
        %v417 = vmin.f32 %v415, %v416
        %v418 = vrot.slane %v417, 1
        %v419 = vmin.f32 %v417, %v418
        %v420 = vmin.f32 %v410, %v412
        %v421 = vrot.slane %v420, 4
        %v422 = vmin.f32 %v420, %v421
        %v423 = vrot.slane %v422, 2
        %v424 = vmin.f32 %v422, %v423
        %v425 = vrot.slane %v424, 1
        %v426 = vmin.f32 %v424, %v425
        %v427 = vlaneseq
        %v428 = vshrl.u32 %v427, 7
        %v429 = vadd.s32 %v428, 8
        %vm430 = vcmp.eq.f32.partialorder %v409, %v419
        %vm431 = vcmp.eq.f32.partialorder %v410, %v426
        %vm432 = vcmp.eq.f32.partialorder %v411, %v419
        %vm433 = vcmp.eq.f32.partialorder %v412, %v426
        %v434 = vsel %vm430, %v428, 16
        %v435 = vsel %vm431, %v428, 16
        %v436 = vsel %vm432, %v429, 16
        %v437 = vsel %vm433, %v429, 16
        %vm438 = vcmp.lt.s32.totalorder %v434, %v436
        %v439 = vsel %vm438, %v434, %v436
        %v440 = vrot.slane %v439, 4
        %vm441 = vcmp.lt.s32.totalorder %v439, %v440
        %v442 = vsel %vm441, %v439, %v440
        %v443 = vrot.slane %v442, 2
        %vm444 = vcmp.lt.s32.totalorder %v442, %v443
        %v445 = vsel %vm444, %v442, %v443
        %v446 = vrot.slane %v445, 1
        %vm447 = vcmp.lt.s32.totalorder %v445, %v446
        %v448 = vsel %vm447, %v445, %v446
        %vm449 = vcmp.lt.s32.totalorder %v435, %v437
        %v450 = vsel %vm449, %v435, %v437
        %v451 = vrot.slane %v450, 4
        %vm452 = vcmp.lt.s32.totalorder %v450, %v451
        %v453 = vsel %vm452, %v450, %v451
        %v454 = vrot.slane %v453, 2
        %vm455 = vcmp.lt.s32.totalorder %v453, %v454
        %v456 = vsel %vm455, %v453, %v454
        %v457 = vrot.slane %v456, 1
        %vm458 = vcmp.lt.s32.totalorder %v456, %v457
        %v459 = vsel %vm458, %v456, %v457
        %vm460 = vcmp.eq.s32.totalorder %v428, %v448
        %vm461 = vcmp.eq.s32.totalorder %v428, %v459
        %vm462 = vcmp.eq.s32.totalorder %v429, %v448
        %vm463 = vcmp.eq.s32.totalorder %v429, %v459
        %v464 = vsel %vm460, 1, 0
        %v465 = vsel %vm461, 1, 0
        %v466 = vsel %vm462, 1, 0
        %v467 = vsel %vm463, 1, 0
        %v468 = vcvt.s32.f32 %v464
        %v469 = vcvt.s32.f32 %v465
        %v470 = vcvt.s32.f32 %v466
        %v471 = vcvt.s32.f32 %v467
        %472 = vxpose.xlu0.b32.start [1/16] %v304, 128
        %473 = vxpose.xlu0.b32.cont [2/16] %v305, 128
        %474 = vxpose.xlu0.b32.cont [3/16] 0.0, 128
        %475 = vxpose.xlu0.b32.cont [4/16] 0.0, 128
        %476 = vxpose.xlu0.b32.cont [5/16] 0.0, 128
        %477 = vxpose.xlu0.b32.cont [6/16] 0.0, 128
        %478 = vxpose.xlu0.b32.cont [7/16] 0.0, 128
        %479 = vxpose.xlu0.b32.cont [8/16] 0.0, 128
        %480 = vxpose.xlu0.b32.cont [9/16] 0.0, 128
        %481 = vxpose.xlu0.b32.cont [10/16] 0.0, 128
        %482 = vxpose.xlu0.b32.cont [11/16] 0.0, 128
        %483 = vxpose.xlu0.b32.cont [12/16] 0.0, 128
        %484 = vxpose.xlu0.b32.cont [13/16] 0.0, 128
        %485 = vxpose.xlu0.b32.cont [14/16] 0.0, 128
        %486 = vxpose.xlu0.b32.cont [15/16] 0.0, 128
        %487 = vxpose.xlu0.b32.end [16/16] 0.0, 128
        %v488 = vpop.trf.xlu0
        %v489 = vpop.trf.xlu0
        %v490 = vpop.trf.xlu0
        %v491 = vpop.trf.xlu0
        %v492 = vpop.trf.xlu0
        %v493 = vpop.trf.xlu0
        %v494 = vpop.trf.xlu0
        %v495 = vpop.trf.xlu0
        %v496 = vpop.trf.xlu0
        %v497 = vpop.trf.xlu0
        %v498 = vpop.trf.xlu0
        %v499 = vpop.trf.xlu0
        %v500 = vpop.trf.xlu0
        %v501 = vpop.trf.xlu0
        %v502 = vpop.trf.xlu0
        %v503 = vpop.trf.xlu0
        %vm504 = vcmask 130048
        %v506 = vsel %vm504, %v488, 0
        %508 = vmatpush.msra.mxu0 0.0
        %509 = vmatpush.msra.mxu0 0.0
        %510 = vmatpush.msra.mxu0 0.0
        %511 = vmatpush.msra.mxu0 0.0
        %512 = vmatpush.msra.mxu0 0.0
        %513 = vmatpush.msra.mxu0 0.0
        %514 = vmatpush.msra.mxu0 0.0
        %515 = vmatpush.msra.mxu0 0.0
        %516 = vmatpush.msra.mxu0 0.0
        %517 = vmatpush.msra.mxu0 0.0
        %518 = vmatpush.msra.mxu0 0.0
        %519 = vmatpush.msra.mxu0 0.0
        %520 = vmatpush.msra.mxu0 0.0
        %521 = vmatpush.msra.mxu0 0.0
        %522 = vmatpush.msra.mxu0 %v470
        %523 = vmatpush.msra.mxu0 %v468
        %524 = vmatmul.f32.gmra.mxu0 %v506
        %v525 = vpop.f32.mrf.mxu0
        %v526 = vadd.f32 0.0, %v525
        %527 = vdwg.mxu0
        %528 = vmatpush.msra.mxu0 0.0
        %529 = vmatpush.msra.mxu0 0.0
        %530 = vmatpush.msra.mxu0 0.0
        %531 = vmatpush.msra.mxu0 0.0
        %532 = vmatpush.msra.mxu0 0.0
        %533 = vmatpush.msra.mxu0 0.0
        %534 = vmatpush.msra.mxu0 0.0
        %535 = vmatpush.msra.mxu0 0.0
        %536 = vmatpush.msra.mxu0 0.0
        %537 = vmatpush.msra.mxu0 0.0
        %538 = vmatpush.msra.mxu0 0.0
        %539 = vmatpush.msra.mxu0 0.0
        %540 = vmatpush.msra.mxu0 0.0
        %541 = vmatpush.msra.mxu0 0.0
        %542 = vmatpush.msra.mxu0 %v471
        %543 = vmatpush.msra.mxu0 %v469
        %544 = vmatmul.f32.gmra.mxu0 %v506
        %v545 = vpop.f32.mrf.mxu0
        %v546 = vadd.f32 0.0, %v545
        %547 = vdwg.mxu0
        %v550 = vrot.slane %v546, 4
        %v551 = vsel %vm315, %v526, %v550
        %553 = vst [vmem:[%s265] sm:$0xff] %v551
        %v554 = vrot.slane %v459, 7
        %vm555 = vcmask 1040384
        %v556 = vsel %vm555, %v448, %v554
        %v557 = vlaneseq
        %vm558 = vcmp.ge.s32.totalorder %v557, 0
        %vm559 = vcmp.lt.s32.totalorder %v557, 256
        %vm560 = vmand %vm558, %vm559
        %561 = vst.msk [vmem:[%s272] sm:$0x3] %vm560, %v556
        %562 = vst [vmem:[#allocation1] ss:$2 sm:$0xff] %v303
        %v563 = vld.sshfl [vmem:[#allocation1] sm:$0xff pattern:$0x75316420]
        %v564 = vld.sshfl [vmem:[#allocation1 + $0x8] sm:$0xff pattern:$0x75316420]
        %v567 = vsub.f32 %v526, %v563
        %v568 = vsub.f32 %v546, %v564
        %v569 = vld [vmem:[#allocation2] sm:$0xff]
        %v570 = vmul.f32 %v567, %v567
        %v571 = vmul.f32 %v568, %v568
        %v574 = vrot.slane %v571, 4
        %v575 = vsel %vm315, %v570, %v574
        %v577 = vadd.f32 %v569, %v575
        %578 = vst [vmem:[#allocation2] sm:$0xff] %v577
        %v579 = vld [vmem:[#allocation3] sm:$0xff]
        %v580 = vld [vmem:[#allocation3 + $0x8] sm:$0xff]
        %v581 = vld [vmem:[#allocation3 + $0x10] sm:$0xff]
        %v582 = vld [vmem:[#allocation3 + $0x18] sm:$0xff]
        %v583 = vadd.f32 %v579, %v468
        %v584 = vadd.f32 %v580, %v469
        %v585 = vadd.f32 %v581, %v470
        %v586 = vadd.f32 %v582, %v471
        %587 = vst [vmem:[#allocation3] sm:$0xff] %v583
        %588 = vst [vmem:[#allocation3 + $0x8] sm:$0xff] %v584
        %589 = vst [vmem:[#allocation3 + $0x10] sm:$0xff] %v585
        %590 = vst [vmem:[#allocation3 + $0x18] sm:$0xff] %v586
        // Predicated region
        $region37: #{tpu_custom_call.1} parent=31 // pred_check
          _
        $region38: #{tpu_custom_call.1} parent=31 // pred_check_branch
          %592 = sbr.rel (%p294) target = $region40
        $region39: #{tpu_custom_call.1} parent=31 // pred_region
          %v593 = vld [vmem:[#allocation2] sm:$0xff]
          %595 = vst [vmem:[#allocation1] ss:$2 sm:$0xff] %v593
          %v596 = vld.sshfl [vmem:[#allocation1] sm:$0xff pattern:$0x75316420]
          %v597 = vld.sshfl [vmem:[#allocation1 + $0x8] sm:$0xff pattern:$0x75316420]
          %v600 = vsel %vm315, %v596, 0.0
          %v601 = vsel %vm315, %v597, 0.0
          %v602 = vadd.f32 %v600, %v601
          %603 = vadd.xlane.f32.xlu0 %v602
          %v604 = vpop.xlane.xlu0 %603
          %v605 = vrot.slane %v604, 4
          %v606 = vadd.f32 %v604, %v605
          %v607 = vrot.slane %v606, 2
          %v608 = vadd.f32 %v606, %v607
          %v609 = vrot.slane %v608, 1
          %v610 = vadd.f32 %v608, %v609
          %s611 = vtos %v610
          %v612 = vstv %s611
          %vm613 = vcmask 0
          %614 = vst.msk [vmem:[#allocation8] sm:$0x1] %vm613, %v612
          %v615 = vld [vmem:[#allocation3] sm:$0xff]
          %v616 = vld [vmem:[#allocation3 + $0x8] sm:$0xff]
          %v617 = vld [vmem:[#allocation3 + $0x10] sm:$0xff]
          %v618 = vld [vmem:[#allocation3 + $0x18] sm:$0xff]
          %v619 = vadd.f32 %v615, %v616
          %620 = vadd.xlane.f32.xlu0 %v619
          %v621 = vpop.xlane.xlu0 %620
          %v622 = vadd.f32 %v617, %v618
          %623 = vadd.xlane.f32.xlu0 %v622
          %v624 = vpop.xlane.xlu0 %623
          %vm625 = vcmask 7168
          %626 = vst.msk [vmem:[%s6] sm:$0xff] %vm625, %v621
          %627 = vst.msk [vmem:[%s6 + $0x8] sm:$0xff] %vm625, %v624
        $region40: #{tpu_custom_call.1} parent=31 // pred_fallthru
          _
        %s628 = sand.u32 %s116, 1
        %s629 = scalar_lea.sflag [#allocation5], %s628
        %s630 = sand.u32 %s116, 1
        %s631 = smul.addr %s630, 8
        %s632 = scalar_lea.vmem [#allocation4], %s631
        %s633 = sand.u32 %s24, 1
        %s634 = scalar_lea.sflag [#allocation7], %s633
        %s635 = sand.u32 %s144, 1
        %s636 = smul.addr %s635, 2
        %s637 = scalar_lea.vmem [#allocation6], %s636
        // Predicated region
        $region41: #{tpu_custom_call.1} parent=31 // pred_check
          %p638 = pneg %p126
        $region42: #{tpu_custom_call.1} parent=31 // pred_check_branch
          %640 = sbr.rel (%p638) target = $region44
        $region43: #{tpu_custom_call.1} parent=31 // pred_region
          %s641 = smul.u32 2, %s29
          %643 = vsyncadd %s629, 0
          %s644 = smul.addr %s28, 2
          %s645 = sadd.s32 %s641, %s644
          %s646 = smul.addr %s645, 4
          %s647 = scalar_lea.hbm %s3, %s646
          %s649 = sshll.u32 %s632, 4
          %s650 = int_to_ptr.vmem [resolvable:$true] %s649
          %s651 = sshll.u32 %s647, 4
          %s652 = int_to_ptr.hbm [resolvable:$true] %s651
          %654 = dma.vmem_to_hbm [thread:$0]  %s650, 128, %s652, %s629
        $region44: #{tpu_custom_call.1} parent=31 // pred_fallthru
          _
        // Predicated region
        $region45: #{tpu_custom_call.1} parent=31 // pred_check
          %p655 = pneg %p154
        $region46: #{tpu_custom_call.1} parent=31 // pred_check_branch
          %657 = sbr.rel (%p655) target = $region48
        $region47: #{tpu_custom_call.1} parent=31 // pred_region
          %s658 = smul.u32 2, %s29
          %660 = vsyncadd %s634, 0
          %s661 = smul.addr %s28, 2
          %s662 = sadd.s32 %s658, %s661
          %s663 = scalar_lea.hbm %s4, %s662
          %s665 = sshll.u32 %s637, 4
          %s666 = int_to_ptr.vmem [resolvable:$true] %s665
          %s667 = sshll.u32 %s663, 4
          %s668 = int_to_ptr.hbm [resolvable:$true] %s667
          %670 = dma.vmem_to_hbm [thread:$0]  %s666, 32, %s668, %s634
        $region48: #{tpu_custom_call.1} parent=31 // pred_fallthru
          _
        // Predicated region
        $region49: #{tpu_custom_call.1} parent=31 // pred_check
          %p671 = pneg %p175
        $region50: #{tpu_custom_call.1} parent=31 // pred_check_branch
          %673 = sbr.rel (%p671) target = $region52
        $region51: #{tpu_custom_call.1} parent=31 // pred_region
          %675 = vsyncadd [#allocation7], 0
          %s677 = sshll.u32 [#allocation8], 4
          %s678 = int_to_ptr.vmem [resolvable:$true] %s677
          %s679 = sshll.u32 %s5, 4
          %s680 = int_to_ptr.hbm [resolvable:$true] %s679
          %682 = dma.vmem_to_hbm [thread:$0]  %s678, 16, %s680, [#allocation7]
        $region52: #{tpu_custom_call.1} parent=31 // pred_fallthru
          _
        // Predicated region
        $region53: #{tpu_custom_call.1} parent=31 // pred_check
          %p683 = pneg %p196
        $region54: #{tpu_custom_call.1} parent=31 // pred_check_branch
          %685 = sbr.rel (%p683) target = $region56
        $region55: #{tpu_custom_call.1} parent=31 // pred_region
          _
        $region56: #{tpu_custom_call.1} parent=31 // pred_fallthru
          _
        // Predicated region
        $region57: #{tpu_custom_call.1} parent=31 // pred_check
          %p686 = pneg %p175
        $region58: #{tpu_custom_call.1} parent=31 // pred_check_branch
          %688 = sbr.rel (%p686) target = $region60
        $region59: #{tpu_custom_call.1} parent=31 // pred_region
          %690 = dma.done [#allocation7], 16
        $region60: #{tpu_custom_call.1} parent=31 // pred_fallthru
          _
        // Predicated region
        $region61: #{tpu_custom_call.1} parent=31 // pred_check
          %p691 = pneg %p196
        $region62: #{tpu_custom_call.1} parent=31 // pred_check_branch
          %693 = sbr.rel (%p691) target = $region64
        $region63: #{tpu_custom_call.1} parent=31 // pred_region
          _
        $region64: #{tpu_custom_call.1} parent=31 // pred_fallthru
          _
      $region32: #{tpu_custom_call.1} parent=5 // pred_fallthru
        _
      %p694 = scmp.le.s32.totalorder 2, %s19
      // Predicated region
      $region65: #{tpu_custom_call.1} parent=5 // pred_check
        %p695 = pneg %p694
      $region66: #{tpu_custom_call.1} parent=5 // pred_check_branch
        %697 = sbr.rel (%p695) target = $region68
      $region67: #{tpu_custom_call.1} parent=5 // pred_region
        %s698 = ssub.s32 %s19, 2
        // Predicated region
        $region69: #{tpu_custom_call.1} parent=67 // pred_check
          %p699 = pneg %p132
        $region70: #{tpu_custom_call.1} parent=67 // pred_check_branch
          %701 = sbr.rel (%p699) target = $region72
        $region71: #{tpu_custom_call.1} parent=67 // pred_region
          %s702 = sand.u32 %s117, 1
          %s703 = scalar_lea.sflag [#allocation5], %s702
          %s704 = sand.u32 %s117, 1
          %s705 = smul.addr %s704, 8
          %s706 = scalar_lea.vmem [#allocation4], %s705
          %708 = dma.done %s703, 128
        $region72: #{tpu_custom_call.1} parent=67 // pred_fallthru
          _
        // Predicated region
        $region73: #{tpu_custom_call.1} parent=67 // pred_check
          %p709 = pneg %p160
        $region74: #{tpu_custom_call.1} parent=67 // pred_check_branch
          %711 = sbr.rel (%p709) target = $region76
        $region75: #{tpu_custom_call.1} parent=67 // pred_region
          %s712 = sand.u32 %s25, 1
          %s713 = scalar_lea.sflag [#allocation7], %s712
          %s714 = sand.u32 %s145, 1
          %s715 = smul.addr %s714, 2
          %s716 = scalar_lea.vmem [#allocation6], %s715
          %718 = dma.done %s713, 32
        $region76: #{tpu_custom_call.1} parent=67 // pred_fallthru
          _
      $region68: #{tpu_custom_call.1} parent=5 // pred_fallthru
        _
    $region6: #{tpu_custom_call.1} parent=1 // loop_footer
      %s23 = sadd.s32 1, %s19
    $region7: #{tpu_custom_call.1} parent=1 // loop_footer_branch
      %18 = sbr.rel target = $region3
    $region8: #{tpu_custom_call.1} parent=1 // loop_exit
      _
    %719 = vsyncpa [#allocation5], 1
    %s720 = scalar_lea.sflag [#allocation5], 1
    %721 = vsyncpa %s720, 1
    %722 = vsyncpa [#allocation7], 1
    %s723 = scalar_lea.sflag [#allocation7], 1
    %724 = vsyncpa %s723, 1

</llo_original>
